<compile_context>
chip_gen: v5e
topology: v5e:2x2
jax: 0.10.0
libtpu: 0.0.40
codegen_flags: <defaults>
</compile_context>

<pallas_src>
import jax
import jax.numpy as jnp
from jax.experimental import pallas as pl
from jax.experimental.pallas import tpu as pltpu


# Below this channel count the contraction is cheaper as a few unrolled VPU
# FMAs; at/above it a single MXU pass is effectively free (kernel is HBM-bound).
_MXU_MIN_C = 16


def _cdiv(a, b):
    return -(-a // b)


def _round_up(a, m):
    return _cdiv(a, m) * m


def _d_block_kernel(x_ref, w_ref, b_ref, o_ref):
    # x_ref: (1, C, T) input tile  (C on sublanes, spatial T on lanes)
    # w_ref: (C, C)    effective weight W' = W + I  (residual folded in)
    # b_ref: (C, 1)    bias (f32)
    # o_ref: (1, C, T) output tile
    x = x_ref[0]                               # (C, T), native dtype
    w = w_ref[...]                             # (C, C), native dtype
    c, t = x.shape
    if c >= _MXU_MIN_C:
        # Native-dtype operands into the MXU, f32 accumulate.
        acc = jnp.dot(w, x, preferred_element_type=jnp.float32)
    else:
        # Tiny C: unrolled VPU multiply-adds (trace-time unroll), MXU idle.
        acc = jnp.zeros((c, t), jnp.float32)
        for ci in range(c):
            acc = acc + (w[:, ci:ci + 1] * x[ci:ci + 1, :]).astype(jnp.float32)
    acc = acc + b_ref[...]                     # lane-broadcast bias add
    o_ref[0] = acc.astype(o_ref.dtype)


def _vmem_budgets():
    """(per-step tile budget, vmem_limit_bytes) gated on TPU generation."""
    vmem = None
    try:
        info = pltpu.get_tpu_info()
        vmem = getattr(info, "vmem_capacity_bytes", None)
    except Exception:
        vmem = None
    if vmem is not None and vmem >= 100 * 1024 * 1024:
        # v5e / v6e: 128 MiB physical VMEM -> bigger tiles, raise scoped limit.
        return 20 * 1024 * 1024, 64 * 1024 * 1024
    # v7x (64 MiB VMEM) or unknown: stay conservative.
    return 10 * 1024 * 1024, 32 * 1024 * 1024


def _pick_lane_tile(hw, c, x_itemsize, w_itemsize, vmem_budget_bytes):
    """Largest lane tile T (multiple of 128) such that the double-buffered
    input + output tiles PLUS the resident (double-buffered) weight/bias
    buffers fit the per-step VMEM budget."""
    hw_pad128 = _round_up(hw, 128)
    # Resident footprint: 2 buffers of (C,C) weight + padded (C,1) bias.
    resident = 2 * c * c * w_itemsize + 2 * _round_up(c, 8) * 128 * 4
    avail = vmem_budget_bytes - resident
    min_step = 4 * c * 128 * x_itemsize        # 2 in + 2 out buffers at T=128
    avail = max(avail, min_step)
    max_t = avail // (4 * c * x_itemsize)
    max_t = max(128, (max_t // 128) * 128)
    return min(hw_pad128, max_t)


def d_pointwise_residual(x_nchw, weight, bias):
    """Representative D: per-pixel  out = W @ x + b + x  (1x1 conv + residual),
    fused in one Pallas kernel.  NCHW in / NCHW out, no transposes: channels
    sit on sublanes, spatial (H*W) on lanes, so stores are lane-dense."""
    N, C, H, W = x_nchw.shape
    assert weight.shape == (C, C) and bias.shape == (C,)
    HW = H * W

    # Fold the residual connection into the weight once: W' = W + I.
    w_eff = (weight + jnp.eye(C, dtype=weight.dtype)).astype(x_nchw.dtype)
    b2 = bias.reshape(C, 1).astype(jnp.float32)

    x = x_nchw.reshape(N, C, HW)               # free reshape (no data movement)
    x_itemsize = x.dtype.itemsize
    w_itemsize = w_eff.dtype.itemsize

    budget, vmem_limit = _vmem_budgets()
    T = _pick_lane_tile(HW, C, x_itemsize, w_itemsize, budget)

    # Guarantee >= 2 grid points when possible so megacore (v7x) has work.
    if N * _cdiv(HW, T) < 2:
        half = _round_up(_cdiv(HW, 2), 128)
        if 128 <= half < T:
            T = half

    # Pad the lane dimension to a multiple of T (cdiv grid, masked tail not
    # needed: padded columns compute W'@0 + b and are sliced off afterwards).
    num_lane_blocks = _cdiv(HW, T)
    HW_pad = num_lane_blocks * T
    if HW_pad != HW:
        x = jnp.pad(x, ((0, 0), (0, 0), (0, HW_pad - HW)))

    grid = (N, num_lane_blocks)

    cost = pl.CostEstimate(
        flops=2 * N * HW_pad * C * C + N * HW_pad * C,
        transcendentals=0,
        bytes_accessed=2 * N * C * HW_pad * x_itemsize
        + C * C * w_itemsize + C * 4,
    )

    out = pl.pallas_call(
        _d_block_kernel,
        out_shape=jax.ShapeDtypeStruct((N, C, HW_pad), x.dtype),
        grid_spec=pltpu.PrefetchScalarGridSpec(
            num_scalar_prefetch=0,
            grid=grid,
            in_specs=[
                pl.BlockSpec((1, C, T), lambda n, t: (n, 0, t)),
                pl.BlockSpec((C, C), lambda n, t: (0, 0)),
                pl.BlockSpec((C, 1), lambda n, t: (0, 0)),
            ],
            out_specs=pl.BlockSpec((1, C, T), lambda n, t: (n, 0, t)),
        ),
        compiler_params=pltpu.CompilerParams(
            dimension_semantics=("parallel", "parallel"),
            vmem_limit_bytes=vmem_limit,
        ),
        cost_estimate=cost,
    )(x, w_eff, b2)

    if HW_pad != HW:
        out = out[:, :, :HW]
    return out.reshape(N, C, H, W)             # free reshape back to NCHW


def aug_wrapper_forward(images, weight, bias, *, y=None, prob=0.0, types=(),
                        detach=False):
    """AugWrapper.forward: with prob=0.0 (the module default) the random
    augmentation branch is never executed, so this is exactly D(images, y)."""
    # TODO(synk): the stochastic random_hflip/DiffAugment branch uses Python-level
    # RNG (random() < prob) and is not translated; prob must be 0.0 here.
    assert prob == 0.0, "stochastic augmentation branch not implemented"
    del y, types, detach
    return d_pointwise_residual(images, weight, bias)


if __name__ == "__main__":
    key = jax.random.PRNGKey(0)
    kx, kw, kb = jax.random.split(key, 3)

    N, C, H, W = 2, 4, 16, 16
    x = jax.random.normal(kx, (N, C, H, W), dtype=jnp.float32)
    # Deterministic parameters for the representative wrapped D (1x1 conv, C->C).
    weight = jax.random.normal(kw, (C, C), dtype=jnp.float32) * 0.1
    bias = jax.random.normal(kb, (C,), dtype=jnp.float32) * 0.1

    out = jax.block_until_ready(aug_wrapper_forward(x, weight, bias, prob=0.0))

    # Reference: D(x) = 1x1 conv + residual, computed in plain JAX.
    ref = jnp.einsum("nchw,oc->nohw", x, weight) + bias[None, :, None, None] + x
    assert out.shape == (N, C, H, W)
    assert jnp.allclose(out, ref, atol=1e-5, rtol=1e-5)

    print("KERNEL_OK")
</pallas_src>

<mosaic_0001>
module attributes {stable_mosaic.version = 11 : i64} {
  func.func @_d_block_kernel(%arg0: i32, %arg1: i32, %arg2: memref<1x4x256xf32, #tpu.memory_space<vmem>>, %arg3: memref<4x4xf32, #tpu.memory_space<vmem>>, %arg4: memref<4x1xf32, #tpu.memory_space<vmem>>, %arg5: memref<1x4x256xf32, #tpu.memory_space<vmem>>) attributes {dimension_semantics = [#tpu.dimension_semantics<parallel>, #tpu.dimension_semantics<parallel>], iteration_bounds = array<i64: 2, 1>, scalar_prefetch = 0 : i64, scratch_operands = 0 : i64, tpu.core_type = #tpu.core_type<tc>, window_params = [{transform_indices = @transform_0, window_bounds = array<i64: 1, 4, 256>}, {pipeline_mode = #tpu.pipeline_mode<synchronous>, transform_indices = @transform_1, window_bounds = array<i64: 4, 4>}, {pipeline_mode = #tpu.pipeline_mode<synchronous>, transform_indices = @transform_2, window_bounds = array<i64: 4, 1>}, {transform_indices = @transform_3, window_bounds = array<i64: 1, 4, 256>}]} {
    %c0 = arith.constant 0 : index
    %c0_0 = arith.constant 0 : index
    %c0_1 = arith.constant 0 : index
    %0 = vector.load %arg2[%c0, %c0_0, %c0_1] : memref<1x4x256xf32, #tpu.memory_space<vmem>>, vector<1x4x256xf32>
    %1 = vector.shape_cast %0 : vector<1x4x256xf32> to vector<4x256xf32>
    %c0_2 = arith.constant 0 : index
    %c0_3 = arith.constant 0 : index
    %2 = vector.load %arg3[%c0_2, %c0_3] : memref<4x4xf32, #tpu.memory_space<vmem>>, vector<4x4xf32>
    %cst = arith.constant 0.000000e+00 : f32
    %3 = vector.broadcast %cst : f32 to vector<4x256xf32>
    %4 = vector.extract_strided_slice %2 {offsets = [0, 0], sizes = [4, 1], strides = [1, 1]} : vector<4x4xf32> to vector<4x1xf32>
    %5 = vector.extract_strided_slice %1 {offsets = [0, 0], sizes = [1, 256], strides = [1, 1]} : vector<4x256xf32> to vector<1x256xf32>
    %6 = vector.broadcast %4 : vector<4x1xf32> to vector<4x256xf32>
    %7 = vector.broadcast %5 : vector<1x256xf32> to vector<4x256xf32>
    %8 = arith.mulf %6, %7 : vector<4x256xf32>
    %9 = arith.addf %3, %8 : vector<4x256xf32>
    %10 = vector.extract_strided_slice %2 {offsets = [0, 1], sizes = [4, 1], strides = [1, 1]} : vector<4x4xf32> to vector<4x1xf32>
    %11 = vector.extract_strided_slice %1 {offsets = [1, 0], sizes = [1, 256], strides = [1, 1]} : vector<4x256xf32> to vector<1x256xf32>
    %12 = vector.broadcast %10 : vector<4x1xf32> to vector<4x256xf32>
    %13 = vector.broadcast %11 : vector<1x256xf32> to vector<4x256xf32>
    %14 = arith.mulf %12, %13 : vector<4x256xf32>
    %15 = arith.addf %9, %14 : vector<4x256xf32>
    %16 = vector.extract_strided_slice %2 {offsets = [0, 2], sizes = [4, 1], strides = [1, 1]} : vector<4x4xf32> to vector<4x1xf32>
    %17 = vector.extract_strided_slice %1 {offsets = [2, 0], sizes = [1, 256], strides = [1, 1]} : vector<4x256xf32> to vector<1x256xf32>
    %18 = vector.broadcast %16 : vector<4x1xf32> to vector<4x256xf32>
    %19 = vector.broadcast %17 : vector<1x256xf32> to vector<4x256xf32>
    %20 = arith.mulf %18, %19 : vector<4x256xf32>
    %21 = arith.addf %15, %20 : vector<4x256xf32>
    %22 = vector.extract_strided_slice %2 {offsets = [0, 3], sizes = [4, 1], strides = [1, 1]} : vector<4x4xf32> to vector<4x1xf32>
    %23 = vector.extract_strided_slice %1 {offsets = [3, 0], sizes = [1, 256], strides = [1, 1]} : vector<4x256xf32> to vector<1x256xf32>
    %24 = vector.broadcast %22 : vector<4x1xf32> to vector<4x256xf32>
    %25 = vector.broadcast %23 : vector<1x256xf32> to vector<4x256xf32>
    %26 = arith.mulf %24, %25 : vector<4x256xf32>
    %27 = arith.addf %21, %26 : vector<4x256xf32>
    %c0_4 = arith.constant 0 : index
    %c0_5 = arith.constant 0 : index
    %28 = vector.load %arg4[%c0_4, %c0_5] : memref<4x1xf32, #tpu.memory_space<vmem>>, vector<4x1xf32>
    %29 = vector.broadcast %28 : vector<4x1xf32> to vector<4x256xf32>
    %30 = arith.addf %27, %29 : vector<4x256xf32>
    %c0_6 = arith.constant 0 : index
    %c0_7 = arith.constant 0 : index
    %c0_8 = arith.constant 0 : index
    %31 = vector.load %arg5[%c0_6, %c0_7, %c0_8] : memref<1x4x256xf32, #tpu.memory_space<vmem>>, vector<1x4x256xf32>
    %32 = vector.shape_cast %31 : vector<1x4x256xf32> to vector<4x256xf32>
    %33 = vector.shape_cast %30 : vector<4x256xf32> to vector<1x4x256xf32>
    tpu.vector_store %arg5[%c0_6, %c0_7, %c0_8], %33 {strides = array<i32>} : memref<1x4x256xf32, #tpu.memory_space<vmem>>, vector<1x4x256xf32>,
    return
  }
  func.func @transform_0(%arg0: i32, %arg1: i32) -> (i32, i32, i32) {
    %c0_i32 = arith.constant 0 : i32
    %c0_i32_0 = arith.constant 0 : i32
    return %arg0, %c0_i32, %arg1 : i32, i32, i32
  }
  func.func @transform_1(%arg0: i32, %arg1: i32) -> (i32, i32) {
    %c0_i32 = arith.constant 0 : i32
    %c0_i32_0 = arith.constant 0 : i32
    %c0_i32_1 = arith.constant 0 : i32
    return %c0_i32, %c0_i32_0 : i32, i32
  }
  func.func @transform_2(%arg0: i32, %arg1: i32) -> (i32, i32) {
    %c0_i32 = arith.constant 0 : i32
    %c0_i32_0 = arith.constant 0 : i32
    %c0_i32_1 = arith.constant 0 : i32
    return %c0_i32, %c0_i32_0 : i32, i32
  }
  func.func @transform_3(%arg0: i32, %arg1: i32) -> (i32, i32, i32) {
    %c0_i32 = arith.constant 0 : i32
    %c0_i32_0 = arith.constant 0 : i32
    return %arg0, %c0_i32, %arg1 : i32, i32, i32
  }
}

</mosaic_0001>

<llo_original>
// kernel: tpu_custom_call.1
$region0: #{tpu_custom_call.1}
  #allocation0 [shape = 'u32[]', space=smem, size = 0x4, offset = 0x4, fixed_abs, tag = 'smem constant byte address 0x4 - core index']
  #allocation1 [shape = 'u32[72,128]{1,0:T(1,128)}', space=vmem, size = 0x9000, scoped, tag = 'internal scratch']
  %s0 = inlined_call_operand.hbm [shape: f32[2,4,256], index: 0, kind: input, shape index: {}]
  %s1 = inlined_call_operand.vmem [shape: f32[4,4], index: 1, kind: input, shape index: {}]
  %s2 = inlined_call_operand.vmem [shape: f32[4,1], index: 2, kind: input, shape index: {}]
  %s3 = inlined_call_operand.hbm [shape: f32[2,4,256], index: 3, kind: output, shape index: {}]
  %s4 = sld [smem:[#allocation0]]
  $region49: #{tpu_custom_call.1} parent=0
    _
  %s6 = ssub.s32 1, %s4
  %s7 = scalar_select 0, %s6, %s4
  $region1: #{tpu_custom_call.1} parent=0
    #allocation2 [shape = 'u8[8192]{0}', space=vmem, size = 0x2000, scoped, tag = 'input window, operand 0']
    #allocation3 [shape = 's32[2]{0}', space=sflag, size = 0x8, scoped, tag = 'scoped memory for tpu_custom_call.1']
    #allocation4 [shape = 's32[2]{0}', space=sflag, size = 0x8, scoped, tag = 'scoped memory for tpu_custom_call.1']
    #allocation5 [shape = 'u8[8192]{0}', space=vmem, size = 0x2000, scoped, tag = 'output window, operand 0']
    %8 = vsyncpa [#allocation3], 0
    %s9 = scalar_lea.sflag [#allocation3], 1
    %10 = vsyncpa %s9, 0
    %11 = vsyncpa [#allocation4], 0
    %s12 = scalar_lea.sflag [#allocation4], 1
    %13 = vsyncpa %s12, 0
    loop: start=0, step=1, limit=4
    $region2: #{tpu_custom_call.1} parent=1 // loop_pre_header
      _
    $region3: #{tpu_custom_call.1} parent=1 // loop_header
      %s15 = sphi 0, %s19
      %p16 = scmp.ge.s32.totalorder %s15, 4
      %s22 = sphi 0, %s34
      %s23 = sphi 0, %s30
      %s24 = sphi 0, %s22
      %s25 = sphi 0, %s23
      %s26 = sphi 0, %s24
      %s27 = sphi 0, %s25
      %s39 = sphi 0, %s41
      %s42 = sphi 0, %s39
      %s43 = sphi 0, %s42
      %s59 = sphi 0, %s43
      %s63 = sphi 0, %s63
      %s65 = sphi 0, %s63
      %s66 = sphi 0, %s65
      %s80 = sphi 0, %s66
      %s84 = sphi 0, %s84
      %s86 = sphi 0, %s84
      %s87 = sphi 0, %s86
      %s101 = sphi 0, %s87
      %s109 = sphi 0, %s111
      %s112 = sphi 0, %s109
      %s113 = sphi 0, %s112
      %s129 = sphi 0, %s113
    $region4: #{tpu_custom_call.1} parent=1 // loop_header_branch
      %18 = sbr.rel (%p16) target = $region8
    $region5: #{tpu_custom_call.1} parent=1 // loop_body
      %s20 = ssub.s32 %s15, 1
      %s21 = ssub.s32 %s15, 2
      %s28 = sadd.s32 1, %s23
      %p29 = scmp.ge.s32.totalorder %s28, 1
      %s30 = scalar_select %p29, 0, %s28
      %s31 = sadd.s32 1, %s22
      %s32 = scalar_select %p29, %s31, %s22
      %p33 = scmp.ge.s32.totalorder %s32, 2
      %s34 = scalar_select %p33, 0, %s32
      %s35 = ssub.s32 %s22, %s34
      %s36 = ssub.s32 %s23, %s30
      %s37 = sor.u32 %s35, %s36
      %p38 = scmp.eq.s32.totalorder %s37, 0
      %s40 = sadd.s32 %s39, 1
      %s41 = scalar_select %p38, %s39, %s40
      %p44 = pneg %p38
      %p45 = scmp.eq.s32.totalorder %s15, 1
      %p46 = por %p44, %p45
      %p47 = scmp.ne.s32.totalorder %s39, %s42
      %p48 = scmp.eq.s32.totalorder %s15, 0
      %p49 = por %p47, %p48
      %p50 = scmp.ne.s32.totalorder %s39, %s42
      %p51 = scmp.eq.s32.totalorder %s20, 1
      %p52 = por %p50, %p51
      %p53 = scmp.ne.s32.totalorder %s42, %s43
      %p54 = scmp.eq.s32.totalorder %s20, 0
      %p55 = por %p53, %p54
      %p56 = scmp.ne.s32.totalorder %s42, %s43
      %p57 = scmp.eq.s32.totalorder %s21, 1
      %p58 = por %p56, %p57
      %p60 = scmp.ne.s32.totalorder %s43, %s59
      %p61 = scmp.eq.s32.totalorder %s21, 0
      %p62 = por %p60, %p61
      %s64 = sadd.s32 %s63, 1
      %p67 = scmp.eq.s32.totalorder %s15, 1
      %p68 = scmp.ne.s32.totalorder %s63, %s65
      %p69 = scmp.eq.s32.totalorder %s15, 0
      %p70 = por %p68, %p69
      %p71 = scmp.ne.s32.totalorder %s63, %s65
      %p72 = scmp.eq.s32.totalorder %s20, 1
      %p73 = por %p71, %p72
      %p74 = scmp.ne.s32.totalorder %s65, %s66
      %p75 = scmp.eq.s32.totalorder %s20, 0
      %p76 = por %p74, %p75
      %p77 = scmp.ne.s32.totalorder %s65, %s66
      %p78 = scmp.eq.s32.totalorder %s21, 1
      %p79 = por %p77, %p78
      %p81 = scmp.ne.s32.totalorder %s66, %s80
      %p82 = scmp.eq.s32.totalorder %s21, 0
      %p83 = por %p81, %p82
      %s85 = sadd.s32 %s84, 1
      %p88 = scmp.eq.s32.totalorder %s15, 1
      %p89 = scmp.ne.s32.totalorder %s84, %s86
      %p90 = scmp.eq.s32.totalorder %s15, 0
      %p91 = por %p89, %p90
      %p92 = scmp.ne.s32.totalorder %s84, %s86
      %p93 = scmp.eq.s32.totalorder %s20, 1
      %p94 = por %p92, %p93
      %p95 = scmp.ne.s32.totalorder %s86, %s87
      %p96 = scmp.eq.s32.totalorder %s20, 0
      %p97 = por %p95, %p96
      %p98 = scmp.ne.s32.totalorder %s86, %s87
      %p99 = scmp.eq.s32.totalorder %s21, 1
      %p100 = por %p98, %p99
      %p102 = scmp.ne.s32.totalorder %s87, %s101
      %p103 = scmp.eq.s32.totalorder %s21, 0
      %p104 = por %p102, %p103
      %s105 = ssub.s32 %s22, %s34
      %s106 = ssub.s32 %s23, %s30
      %s107 = sor.u32 %s105, %s106
      %p108 = scmp.eq.s32.totalorder %s107, 0
      %s110 = sadd.s32 %s109, 1
      %s111 = scalar_select %p108, %s109, %s110
      %p114 = pneg %p108
      %p115 = scmp.eq.s32.totalorder %s15, 1
      %p116 = por %p114, %p115
      %p117 = scmp.ne.s32.totalorder %s109, %s112
      %p118 = scmp.eq.s32.totalorder %s15, 0
      %p119 = por %p117, %p118
      %p120 = scmp.ne.s32.totalorder %s109, %s112
      %p121 = scmp.eq.s32.totalorder %s20, 1
      %p122 = por %p120, %p121
      %p123 = scmp.ne.s32.totalorder %s112, %s113
      %p124 = scmp.eq.s32.totalorder %s20, 0
      %p125 = por %p123, %p124
      %p126 = scmp.ne.s32.totalorder %s112, %s113
      %p127 = scmp.eq.s32.totalorder %s21, 1
      %p128 = por %p126, %p127
      %p130 = scmp.ne.s32.totalorder %s113, %s129
      %p131 = scmp.eq.s32.totalorder %s21, 0
      %p132 = por %p130, %p131
      %p133 = scmp.le.s32.totalorder 1, %s15
      %p134 = scmp.lt.s32.totalorder %s15, 3
      %p135 = pnand %p133, %p134
      %p136 = pneg %p135
      // Predicated region
      $region9: #{tpu_custom_call.1} parent=5 // pred_check
        _
      $region10: #{tpu_custom_call.1} parent=5 // pred_check_branch
        %138 = sbr.rel (%p135) target = $region12
      $region11: #{tpu_custom_call.1} parent=5 // pred_region
        %s139 = ssub.s32 %s15, 1
        // Predicated region
        $region13: #{tpu_custom_call.1} parent=11 // pred_check
          %p140 = pneg %p76
        $region14: #{tpu_custom_call.1} parent=11 // pred_check_branch
          %142 = sbr.rel (%p140) target = $region16
        $region15: #{tpu_custom_call.1} parent=11 // pred_region
          _
        $region16: #{tpu_custom_call.1} parent=11 // pred_fallthru
          _
        // Predicated region
        $region17: #{tpu_custom_call.1} parent=11 // pred_check
          %p143 = pneg %p97
        $region18: #{tpu_custom_call.1} parent=11 // pred_check_branch
          %145 = sbr.rel (%p143) target = $region20
        $region19: #{tpu_custom_call.1} parent=11 // pred_region
          _
        $region20: #{tpu_custom_call.1} parent=11 // pred_fallthru
          _
      $region12: #{tpu_custom_call.1} parent=5 // pred_fallthru
        _
      %p146 = scmp.lt.s32.totalorder %s15, 2
      // Predicated region
      $region21: #{tpu_custom_call.1} parent=5 // pred_check
        %p147 = pneg %p146
      $region22: #{tpu_custom_call.1} parent=5 // pred_check_branch
        %149 = sbr.rel (%p147) target = $region24
      $region23: #{tpu_custom_call.1} parent=5 // pred_region
        // Predicated region
        $region25: #{tpu_custom_call.1} parent=23 // pred_check
          %p150 = pneg %p49
        $region26: #{tpu_custom_call.1} parent=23 // pred_check_branch
          %152 = sbr.rel (%p150) target = $region28
        $region27: #{tpu_custom_call.1} parent=23 // pred_region
          %s153 = sand.u32 %s39, 1
          %s154 = scalar_lea.sflag [#allocation3], %s153
          %s155 = sand.u32 %s39, 1
          %s156 = smul.addr %s155, 8
          %s157 = scalar_lea.vmem [#allocation2], %s156
          %s158 = smul.u32 2, %s23
          %160 = vsyncadd %s154, 0
          %s161 = smul.addr %s22, 2
          %s162 = sadd.s32 %s158, %s161
          %s163 = smul.addr %s162, 4
          %s164 = scalar_lea.hbm %s0, %s163
          %s166 = sshll.u32 %s164, 4
          %s167 = int_to_ptr.hbm [resolvable:$true] %s166
          %s168 = sshll.u32 %s157, 4
          %s169 = int_to_ptr.vmem [resolvable:$true] %s168
          %171 = dma.hbm_to_vmem [thread:$0]  %s167, 128, %s169, %s154
        $region28: #{tpu_custom_call.1} parent=23 // pred_fallthru
          _
      $region24: #{tpu_custom_call.1} parent=5 // pred_fallthru
        _
      %p172 = scmp.le.s32.totalorder 1, %s15
      %p173 = scmp.lt.s32.totalorder %s15, 3
      %p174 = pnand %p172, %p173
      %p175 = pneg %p174
      // Predicated region
      $region29: #{tpu_custom_call.1} parent=5 // pred_check
        _
      $region30: #{tpu_custom_call.1} parent=5 // pred_check_branch
        %177 = sbr.rel (%p174) target = $region32
      $region31: #{tpu_custom_call.1} parent=5 // pred_region
        %s178 = ssub.s32 %s15, 1
        %s179 = sand.u32 %s42, 1
        %s180 = scalar_lea.sflag [#allocation3], %s179
        %s181 = sand.u32 %s42, 1
        %s182 = smul.addr %s181, 8
        %s183 = scalar_lea.vmem [#allocation2], %s182
        // Predicated region
        $region33: #{tpu_custom_call.1} parent=31 // pred_check
          %p184 = pneg %p55
        $region34: #{tpu_custom_call.1} parent=31 // pred_check_branch
          %186 = sbr.rel (%p184) target = $region36
        $region35: #{tpu_custom_call.1} parent=31 // pred_region
          %188 = dma.done %s180, 128
        $region36: #{tpu_custom_call.1} parent=31 // pred_fallthru
          _
        %s189 = sand.u32 %s42, 1
        %s190 = scalar_lea.sflag [#allocation3], %s189
        %s191 = sand.u32 %s42, 1
        %s192 = smul.addr %s191, 8
        %s193 = scalar_lea.vmem [#allocation2], %s192
        %p194 = pneg %p55
        %p195 = pneg %p52
        %p196 = pneg %p76
        %p197 = pneg %p73
        %p198 = pneg %p97
        %p199 = pneg %p94
        %p200 = pneg %p125
        %p201 = pneg %p122
        %s202 = sand.u32 %s112, 1
        %s203 = scalar_lea.sflag [#allocation4], %s202
        %s204 = sand.u32 %s112, 1
        %s205 = smul.addr %s204, 8
        %s206 = scalar_lea.vmem [#allocation5], %s205
        %s207 = smul.u32 2, %s25
        %s208 = smul.u32 2, %s25
        %v209 = vld [vmem:[%s183] sm:$0xff]
        %v210 = vld [vmem:[%s1] sm:$0xf]
        %212 = vset.pattern.permute.xlu0 0
        %213 = vperm.xlu0 %212, %v210
        %v214 = vpop.permute.xlu0 %213
        %v217 = vperm.slane %v209, 0
        %v218 = vperm.slane %v209, 4
        %v221 = vperm.slane %v217, 0
        %v222 = vperm.slane %v218, 0
        %v223 = vmul.f32 %v214, %v221
        %v224 = vmul.f32 %v214, %v222
        %v225 = vadd.f32 %v223, 0.0
        %v226 = vadd.f32 %v224, 0.0
        %227 = vset.pattern.permute.xlu0 1
        %228 = vperm.xlu0 %227, %v210
        %v229 = vpop.permute.xlu0 %228
        %v231 = vperm.slane %v209, 1
        %v232 = vperm.slane %v209, 5
        %v235 = vperm.slane %v231, 1
        %v236 = vperm.slane %v232, 1
        %v237 = vmul.f32 %v229, %v235
        %v238 = vmul.f32 %v229, %v236
        %v239 = vadd.f32 %v225, %v237
        %v240 = vadd.f32 %v226, %v238
        %241 = vset.pattern.permute.xlu0 2
        %242 = vperm.xlu0 %241, %v210
        %v243 = vpop.permute.xlu0 %242
        %v245 = vperm.slane %v209, 2
        %v246 = vperm.slane %v209, 6
        %v249 = vperm.slane %v245, 2
        %v250 = vperm.slane %v246, 2
        %v251 = vmul.f32 %v243, %v249
        %v252 = vmul.f32 %v243, %v250
        %v253 = vadd.f32 %v239, %v251
        %v254 = vadd.f32 %v240, %v252
        %255 = vset.pattern.permute.xlu0 3
        %256 = vperm.xlu0 %255, %v210
        %v257 = vpop.permute.xlu0 %256
        %v259 = vperm.slane %v209, 3
        %v260 = vperm.slane %v209, 7
        %v263 = vperm.slane %v259, 3
        %v264 = vperm.slane %v260, 3
        %v265 = vmul.f32 %v257, %v263
        %v266 = vmul.f32 %v257, %v264
        %v267 = vadd.f32 %v253, %v265
        %v268 = vadd.f32 %v254, %v266
        %v269 = vld [vmem:[%s2] sm:$0xf]
        %271 = vset.pattern.permute.xlu0 0
        %272 = vperm.xlu0 %271, %v269
        %v273 = vpop.permute.xlu0 %272
        %v275 = vadd.f32 %v267, %v273
        %v276 = vadd.f32 %v268, %v273
        %v279 = vrot.slane %v276, 4
        %vm280 = vcmask 1043456
        %v281 = vsel %vm280, %v275, %v279
        %283 = vst [vmem:[%s206] sm:$0xff] %v281
        %s284 = sand.u32 %s112, 1
        %s285 = scalar_lea.sflag [#allocation4], %s284
        %s286 = sand.u32 %s112, 1
        %s287 = smul.addr %s286, 8
        %s288 = scalar_lea.vmem [#allocation5], %s287
        // Predicated region
        $region37: #{tpu_custom_call.1} parent=31 // pred_check
          %p289 = pneg %p122
        $region38: #{tpu_custom_call.1} parent=31 // pred_check_branch
          %291 = sbr.rel (%p289) target = $region40
        $region39: #{tpu_custom_call.1} parent=31 // pred_region
          %s292 = smul.u32 2, %s25
          %294 = vsyncadd %s285, 0
          %s295 = smul.addr %s24, 2
          %s296 = sadd.s32 %s292, %s295
          %s297 = smul.addr %s296, 4
          %s298 = scalar_lea.hbm %s3, %s297
          %s300 = sshll.u32 %s288, 4
          %s301 = int_to_ptr.vmem [resolvable:$true] %s300
          %s302 = sshll.u32 %s298, 4
          %s303 = int_to_ptr.hbm [resolvable:$true] %s302
          %305 = dma.vmem_to_hbm [thread:$0]  %s301, 128, %s303, %s285
        $region40: #{tpu_custom_call.1} parent=31 // pred_fallthru
          _
      $region32: #{tpu_custom_call.1} parent=5 // pred_fallthru
        _
      %p306 = scmp.le.s32.totalorder 2, %s15
      // Predicated region
      $region41: #{tpu_custom_call.1} parent=5 // pred_check
        %p307 = pneg %p306
      $region42: #{tpu_custom_call.1} parent=5 // pred_check_branch
        %309 = sbr.rel (%p307) target = $region44
      $region43: #{tpu_custom_call.1} parent=5 // pred_region
        %s310 = ssub.s32 %s15, 2
        // Predicated region
        $region45: #{tpu_custom_call.1} parent=43 // pred_check
          %p311 = pneg %p128
        $region46: #{tpu_custom_call.1} parent=43 // pred_check_branch
          %313 = sbr.rel (%p311) target = $region48
        $region47: #{tpu_custom_call.1} parent=43 // pred_region
          %s314 = sand.u32 %s113, 1
          %s315 = scalar_lea.sflag [#allocation4], %s314
          %s316 = sand.u32 %s113, 1
          %s317 = smul.addr %s316, 8
          %s318 = scalar_lea.vmem [#allocation5], %s317
          %320 = dma.done %s315, 128
        $region48: #{tpu_custom_call.1} parent=43 // pred_fallthru
          _
      $region44: #{tpu_custom_call.1} parent=5 // pred_fallthru
        _
    $region6: #{tpu_custom_call.1} parent=1 // loop_footer
      %s19 = sadd.s32 1, %s15
    $region7: #{tpu_custom_call.1} parent=1 // loop_footer_branch
      %14 = sbr.rel target = $region3
    $region8: #{tpu_custom_call.1} parent=1 // loop_exit
      _
    %321 = vsyncpa [#allocation3], 1
    %s322 = scalar_lea.sflag [#allocation3], 1
    %323 = vsyncpa %s322, 1
    %324 = vsyncpa [#allocation4], 1
    %s325 = scalar_lea.sflag [#allocation4], 1
    %326 = vsyncpa %s325, 1

</llo_original>
